<compile_context>
chip_gen: v5e
topology: v5e:2x2
jax: 0.10.0
libtpu: 0.0.40
codegen_flags: <defaults>
</compile_context>

<pallas_src>
import functools

import jax
import jax.numpy as jnp
from jax.experimental import pallas as pl
from jax.experimental.pallas import tpu as pltpu


def _focal_kernel(x_ref, t_ref, o_ref, *, alpha, gamma, eps, onehot_eps):
    # x_ref: (BN, C, TL) logits block (classes on sublanes, spatial on lanes)
    # t_ref: (BN, TL) int32 labels
    # o_ref: (BN, TL) per-position loss (lane-dense output block)
    x = x_ref[...].astype(jnp.float32)
    t = t_ref[...]

    # Numerically-stable softmax over the class (sublane) axis, + eps,
    # matching F.softmax(dim=1) + eps of the reference.
    m = jnp.max(x, axis=1, keepdims=True)                 # (BN, 1, TL)
    e = jnp.exp(x - m)
    denom = jnp.sum(e, axis=1, keepdims=True)
    p = e * pl.reciprocal(denom, approx=False) + eps      # (BN, C, TL)

    # focal weight (1 - p)^gamma.
    #  - small integer gamma (the common case, e.g. gamma=2): unrolled VPU
    #    multiplies, no extra EUP transcendentals.
    #  - otherwise fall back to pow; clamp the base at 0 so a p that saturates
    #    marginally above 1 (difference ~1e-24 in the loss) cannot produce NaN.
    base = 1.0 - p
    if float(gamma).is_integer() and 0.0 <= gamma <= 8.0:
        gi = int(gamma)
        if gi == 0:
            weight = jnp.ones_like(base)
        else:
            weight = base
            for _ in range(gi - 1):
                weight = weight * base
    else:
        weight = jnp.power(jnp.maximum(base, 0.0), gamma)

    focal = (-alpha) * weight * jnp.log(p)

    # one_hot(target) + onehot_eps  (reference one_hot adds 1e-6 everywhere).
    cls = jax.lax.broadcasted_iota(jnp.int32, x.shape, 1)  # class id per sublane
    onehot = jnp.where(cls == t[:, None, :], 1.0 + onehot_eps, onehot_eps)

    loss = jnp.sum(onehot * focal, axis=1)                 # (BN, TL)
    o_ref[...] = loss.astype(o_ref.dtype)


def focal_loss_pallas(logits, target, alpha, gamma=2.0, reduction="none",
                      eps=1e-8):
    """Pallas implementation of kornia-style focal_loss forward.

    logits: (N, C, *spatial) float (f32 or bf16)
    target: (N, *spatial) integer labels in [0, C)
    """
    N = logits.shape[0]
    C = logits.shape[1]
    spatial = logits.shape[2:]
    HW = 1
    for s in spatial:
        HW *= s

    # Free reshapes of contiguous NCHW data -- no transpose, no dtype cast.
    x = logits.reshape(N, C, HW)
    t = target.reshape(N, HW).astype(jnp.int32)

    LANE = 128
    BN = N if N <= 8 else 8            # full dim or multiple of 8 -> tileable

    # Size the lane tile so one logits block is ~1 MiB (double-buffered by
    # Pallas; plus a handful of f32 intermediates of the same size in-kernel
    # this stays well inside the scoped-VMEM defaults on v5e/v6e/v7x).
    budget_bytes = 1 << 20
    max_tl = (budget_bytes // (BN * C * 4)) // LANE * LANE
    max_tl = max(LANE, min(32768, max_tl))

    n_row_tiles = -(-N // BN)
    if HW <= max_tl:
        TL, HWp = HW, HW               # single lane tile; full-dim block, no pad
        # If the whole problem would be one grid step, split the lane axis so
        # both TensorCores (v7x megacore) get work.
        if n_row_tiles == 1 and HW % (2 * LANE) == 0:
            TL = HW // 2
    elif HW % LANE == 0:
        TL, HWp = max_tl, HW           # aligned lane dim; ragged last block OK
    else:
        # Rare: large, lane-unaligned spatial extent -> pad to a lane multiple.
        TL = max_tl
        HWp = -(-HW // LANE) * LANE

    if HWp != HW:
        x = jnp.pad(x, ((0, 0), (0, 0), (0, HWp - HW)))
        t = jnp.pad(t, ((0, 0), (0, HWp - HW)))

    grid = (n_row_tiles, pl.cdiv(HWp, TL))

    kernel = functools.partial(
        _focal_kernel, alpha=float(alpha), gamma=float(gamma),
        eps=float(eps), onehot_eps=1e-6,
    )

    out = pl.pallas_call(
        kernel,
        out_shape=jax.ShapeDtypeStruct((N, HWp), jnp.float32),
        grid_spec=pltpu.PrefetchScalarGridSpec(
            num_scalar_prefetch=0,
            grid=grid,
            in_specs=[
                pl.BlockSpec((BN, C, TL), lambda b, l: (b, 0, l)),
                pl.BlockSpec((BN, TL), lambda b, l: (b, l)),
            ],
            out_specs=pl.BlockSpec((BN, TL), lambda b, l: (b, l)),
        ),
        compiler_params=pltpu.CompilerParams(
            dimension_semantics=("parallel", "parallel")),
    )(x, t)

    loss = out[:, :HW].reshape((N,) + spatial)

    if reduction == "none":
        return loss
    elif reduction == "mean":
        return jnp.mean(loss)
    elif reduction == "sum":
        return jnp.sum(loss)
    else:
        raise NotImplementedError(f"Invalid reduction mode: {reduction}")


class FocalLoss:
    """JAX/Pallas counterpart of the PyTorch FocalLoss module (no parameters)."""

    def __init__(self, alpha, gamma=2.0, reduction="none", eps=1e-8):
        self.alpha = alpha
        self.gamma = gamma
        self.reduction = reduction
        self.eps = eps

    def __call__(self, logits, target):
        return focal_loss_pallas(logits, target, self.alpha, self.gamma,
                                 self.reduction, self.eps)


def _focal_loss_ref(logits, target, alpha, gamma=2.0, reduction="none",
                    eps=1e-8):
    # pure-JAX reference matching the PyTorch code exactly
    C = logits.shape[1]
    p = jax.nn.softmax(logits.astype(jnp.float32), axis=1) + eps
    onehot = jax.nn.one_hot(target, C, axis=1, dtype=jnp.float32) + 1e-6
    weight = jnp.power(1.0 - p, gamma)
    focal = -alpha * weight * jnp.log(p)
    loss_tmp = jnp.sum(onehot * focal, axis=1)
    if reduction == "none":
        return loss_tmp
    if reduction == "mean":
        return jnp.mean(loss_tmp)
    return jnp.sum(loss_tmp)


if __name__ == "__main__":
    key = jax.random.PRNGKey(0)
    k1, k2 = jax.random.split(key)

    N, C, H, W = 2, 4, 16, 16
    logits = jax.random.normal(k1, (N, C, H, W), dtype=jnp.float32)
    target = jax.random.randint(k2, (N, H, W), 0, C, dtype=jnp.int32)

    # reduction='none', gamma=2 (integer fast path)
    criterion = FocalLoss(alpha=0.5, gamma=2.0, reduction="none", eps=1e-8)
    out = jax.block_until_ready(criterion(logits, target))
    ref = _focal_loss_ref(logits, target, alpha=0.5, gamma=2.0,
                          reduction="none", eps=1e-8)
    assert out.shape == (N, H, W)
    assert jnp.allclose(out, ref, rtol=1e-5, atol=1e-6), (
        float(jnp.max(jnp.abs(out - ref))))

    # 'mean' reduction path
    mean_loss = jax.block_until_ready(
        focal_loss_pallas(logits, target, alpha=0.5, gamma=2.0,
                          reduction="mean"))
    assert jnp.allclose(mean_loss, jnp.mean(ref), rtol=1e-5, atol=1e-6)

    # non-integer gamma exercises the pow fallback, with 'sum' reduction
    sum_loss = jax.block_until_ready(
        focal_loss_pallas(logits, target, alpha=0.25, gamma=1.5,
                          reduction="sum"))
    ref_sum = _focal_loss_ref(logits, target, alpha=0.25, gamma=1.5,
                              reduction="sum")
    assert jnp.allclose(sum_loss, ref_sum, rtol=1e-5, atol=1e-6)

    print("KERNEL_OK")
</pallas_src>

<mosaic_0001>
module attributes {stable_mosaic.version = 11 : i64} {
  func.func @_focal_kernel(%arg0: i32, %arg1: i32, %arg2: memref<2x4x128xf32, #tpu.memory_space<vmem>>, %arg3: memref<2x128xi32, #tpu.memory_space<vmem>>, %arg4: memref<2x128xf32, #tpu.memory_space<vmem>>) attributes {dimension_semantics = [#tpu.dimension_semantics<parallel>, #tpu.dimension_semantics<parallel>], iteration_bounds = array<i64: 1, 2>, scalar_prefetch = 0 : i64, scratch_operands = 0 : i64, tpu.core_type = #tpu.core_type<tc>, window_params = [{transform_indices = @transform_0, window_bounds = array<i64: 2, 4, 128>}, {transform_indices = @transform_1, window_bounds = array<i64: 2, 128>}, {transform_indices = @transform_2, window_bounds = array<i64: 2, 128>}]} {
    %c0 = arith.constant 0 : index
    %c0_0 = arith.constant 0 : index
    %c0_1 = arith.constant 0 : index
    %0 = vector.load %arg2[%c0, %c0_0, %c0_1] : memref<2x4x128xf32, #tpu.memory_space<vmem>>, vector<2x4x128xf32>
    %c0_2 = arith.constant 0 : index
    %c0_3 = arith.constant 0 : index
    %1 = vector.load %arg3[%c0_2, %c0_3] : memref<2x128xi32, #tpu.memory_space<vmem>>, vector<2x128xi32>
    %cst = arith.constant dense<0xFF800000> : vector<2x128xf32>
    %2 = vector.multi_reduction <maximumf>, %0, %cst [1] : vector<2x4x128xf32> to vector<2x128xf32>
    %3 = vector.shape_cast %2 : vector<2x128xf32> to vector<2x1x128xf32>
    %4 = vector.broadcast %3 : vector<2x1x128xf32> to vector<2x4x128xf32>
    %5 = arith.subf %0, %4 : vector<2x4x128xf32>
    %6 = math.exp %5 : vector<2x4x128xf32>
    %cst_4 = arith.constant dense<0.000000e+00> : vector<2x128xf32>
    %7 = vector.multi_reduction <add>, %6, %cst_4 [1] : vector<2x4x128xf32> to vector<2x128xf32>
    %8 = vector.shape_cast %7 : vector<2x128xf32> to vector<2x1x128xf32>
    %9 = tpu.reciprocal %8 : vector<2x1x128xf32> -> vector<2x1x128xf32>
    %10 = vector.broadcast %9 : vector<2x1x128xf32> to vector<2x4x128xf32>
    %11 = arith.mulf %6, %10 : vector<2x4x128xf32>
    %cst_5 = arith.constant 9.99999993E-9 : f32
    %12 = vector.broadcast %cst_5 : f32 to vector<2x4x128xf32>
    %13 = arith.addf %11, %12 : vector<2x4x128xf32>
    %cst_6 = arith.constant 1.000000e+00 : f32
    %14 = vector.broadcast %cst_6 : f32 to vector<2x4x128xf32>
    %15 = arith.subf %14, %13 : vector<2x4x128xf32>
    %16 = arith.mulf %15, %15 : vector<2x4x128xf32>
    %cst_7 = arith.constant -5.000000e-01 : f32
    %17 = vector.broadcast %cst_7 : f32 to vector<2x4x128xf32>
    %18 = arith.mulf %17, %16 : vector<2x4x128xf32>
    %19 = math.log %13 : vector<2x4x128xf32>
    %20 = arith.mulf %18, %19 : vector<2x4x128xf32>
    %21 = tpu.iota {dimensions = array<i32: 1>} : vector<2x4x128xi32>
    %22 = vector.shape_cast %1 : vector<2x128xi32> to vector<2x1x128xi32>
    %23 = vector.broadcast %22 : vector<2x1x128xi32> to vector<2x4x128xi32>
    %24 = arith.cmpi eq, %21, %23 : vector<2x4x128xi32>
    %cst_8 = arith.constant 1.00000095 : f32
    %cst_9 = arith.constant 9.99999997E-7 : f32
    %25 = vector.broadcast %cst_8 : f32 to vector<2x4x128xf32>
    %26 = vector.broadcast %cst_9 : f32 to vector<2x4x128xf32>
    %27 = arith.select %24, %25, %26 : vector<2x4x128xi1>, vector<2x4x128xf32>
    %28 = arith.mulf %27, %20 : vector<2x4x128xf32>
    %cst_10 = arith.constant dense<0.000000e+00> : vector<2x128xf32>
    %29 = vector.multi_reduction <add>, %28, %cst_10 [1] : vector<2x4x128xf32> to vector<2x128xf32>
    %c0_11 = arith.constant 0 : index
    %c0_12 = arith.constant 0 : index
    %30 = vector.load %arg4[%c0_11, %c0_12] : memref<2x128xf32, #tpu.memory_space<vmem>>, vector<2x128xf32>
    tpu.vector_store %arg4[%c0_11, %c0_12], %29 {strides = array<i32>} : memref<2x128xf32, #tpu.memory_space<vmem>>, vector<2x128xf32>,
    return
  }
  func.func @transform_0(%arg0: i32, %arg1: i32) -> (i32, i32, i32) {
    %c0_i32 = arith.constant 0 : i32
    %c0_i32_0 = arith.constant 0 : i32
    return %arg0, %c0_i32, %arg1 : i32, i32, i32
  }
  func.func @transform_1(%arg0: i32, %arg1: i32) -> (i32, i32) {
    %c0_i32 = arith.constant 0 : i32
    return %arg0, %arg1 : i32, i32
  }
  func.func @transform_2(%arg0: i32, %arg1: i32) -> (i32, i32) {
    %c0_i32 = arith.constant 0 : i32
    return %arg0, %arg1 : i32, i32
  }
}

</mosaic_0001>

<llo_original>
// kernel: tpu_custom_call.1
$region0: #{tpu_custom_call.1}
  #allocation0 [shape = 'u32[]', space=smem, size = 0x4, offset = 0x4, fixed_abs, tag = 'smem constant byte address 0x4 - core index']
  #allocation1 [shape = 'u32[72,128]{1,0:T(1,128)}', space=vmem, size = 0x9000, scoped, tag = 'internal scratch']
  %s0 = inlined_call_operand.hbm [shape: f32[2,4,256], index: 0, kind: input, shape index: {}]
  %s1 = inlined_call_operand.hbm [shape: s32[2,256], index: 1, kind: input, shape index: {}]
  %s2 = inlined_call_operand.hbm [shape: f32[2,256], index: 2, kind: output, shape index: {}]
  %s3 = sld [smem:[#allocation0]]
  $region49: #{tpu_custom_call.1} parent=0
    _
  %s5 = ssub.s32 1, %s3
  %s6 = scalar_select 0, %s5, %s3
  $region1: #{tpu_custom_call.1} parent=0
    #allocation2 [shape = 'u8[8192]{0}', space=vmem, size = 0x2000, scoped, tag = 'input window, operand 0']
    #allocation3 [shape = 's32[2]{0}', space=sflag, size = 0x8, scoped, tag = 'scoped memory for tpu_custom_call.1']
    #allocation4 [shape = 's32[2]{0}', space=sflag, size = 0x8, scoped, tag = 'scoped memory for tpu_custom_call.1']
    #allocation5 [shape = 'u8[2048]{0}', space=vmem, size = 0x800, scoped, tag = 'input window, operand 1']
    #allocation6 [shape = 's32[2]{0}', space=sflag, size = 0x8, scoped, tag = 'scoped memory for tpu_custom_call.1']
    #allocation7 [shape = 'u8[2048]{0}', space=vmem, size = 0x800, scoped, tag = 'output window, operand 0']
    %7 = vsyncpa [#allocation3], 0
    %s8 = scalar_lea.sflag [#allocation3], 1
    %9 = vsyncpa %s8, 0
    %10 = vsyncpa [#allocation6], 0
    %s11 = scalar_lea.sflag [#allocation6], 1
    %12 = vsyncpa %s11, 0
    %13 = vsyncpa [#allocation4], 0
    %s14 = scalar_lea.sflag [#allocation4], 1
    %15 = vsyncpa %s14, 0
    loop: start=0, step=1, limit=4
    $region2: #{tpu_custom_call.1} parent=1 // loop_pre_header
      _
    $region3: #{tpu_custom_call.1} parent=1 // loop_header
      %s17 = sphi 0, %s21
      %p18 = scmp.ge.s32.totalorder %s17, 4
      %s24 = sphi 0, %s36
      %s25 = sphi 0, %s32
      %s26 = sphi 0, %s24
      %s27 = sphi 0, %s25
      %s28 = sphi 0, %s26
      %s29 = sphi 0, %s27
      %s41 = sphi 0, %s43
      %s44 = sphi 0, %s41
      %s45 = sphi 0, %s44
      %s61 = sphi 0, %s45
      %s69 = sphi 0, %s71
      %s72 = sphi 0, %s69
      %s73 = sphi 0, %s72
      %s89 = sphi 0, %s73
      %s97 = sphi 0, %s99
      %s100 = sphi 0, %s97
      %s101 = sphi 0, %s100
      %s117 = sphi 0, %s101
    $region4: #{tpu_custom_call.1} parent=1 // loop_header_branch
      %20 = sbr.rel (%p18) target = $region8
    $region5: #{tpu_custom_call.1} parent=1 // loop_body
      %s22 = ssub.s32 %s17, 1
      %s23 = ssub.s32 %s17, 2
      %s30 = sadd.s32 1, %s25
      %p31 = scmp.ge.s32.totalorder %s30, 2
      %s32 = scalar_select %p31, 0, %s30
      %s33 = sadd.s32 1, %s24
      %s34 = scalar_select %p31, %s33, %s24
      %p35 = scmp.ge.s32.totalorder %s34, 1
      %s36 = scalar_select %p35, 0, %s34
      %s37 = ssub.s32 %s24, %s36
      %s38 = ssub.s32 %s25, %s32
      %s39 = sor.u32 %s37, %s38
      %p40 = scmp.eq.s32.totalorder %s39, 0
      %s42 = sadd.s32 %s41, 1
      %s43 = scalar_select %p40, %s41, %s42
      %p46 = pneg %p40
      %p47 = scmp.eq.s32.totalorder %s17, 1
      %p48 = por %p46, %p47
      %p49 = scmp.ne.s32.totalorder %s41, %s44
      %p50 = scmp.eq.s32.totalorder %s17, 0
      %p51 = por %p49, %p50
      %p52 = scmp.ne.s32.totalorder %s41, %s44
      %p53 = scmp.eq.s32.totalorder %s22, 1
      %p54 = por %p52, %p53
      %p55 = scmp.ne.s32.totalorder %s44, %s45
      %p56 = scmp.eq.s32.totalorder %s22, 0
      %p57 = por %p55, %p56
      %p58 = scmp.ne.s32.totalorder %s44, %s45
      %p59 = scmp.eq.s32.totalorder %s23, 1
      %p60 = por %p58, %p59
      %p62 = scmp.ne.s32.totalorder %s45, %s61
      %p63 = scmp.eq.s32.totalorder %s23, 0
      %p64 = por %p62, %p63
      %s65 = ssub.s32 %s24, %s36
      %s66 = ssub.s32 %s25, %s32
      %s67 = sor.u32 %s65, %s66
      %p68 = scmp.eq.s32.totalorder %s67, 0
      %s70 = sadd.s32 %s69, 1
      %s71 = scalar_select %p68, %s69, %s70
      %p74 = pneg %p68
      %p75 = scmp.eq.s32.totalorder %s17, 1
      %p76 = por %p74, %p75
      %p77 = scmp.ne.s32.totalorder %s69, %s72
      %p78 = scmp.eq.s32.totalorder %s17, 0
      %p79 = por %p77, %p78
      %p80 = scmp.ne.s32.totalorder %s69, %s72
      %p81 = scmp.eq.s32.totalorder %s22, 1
      %p82 = por %p80, %p81
      %p83 = scmp.ne.s32.totalorder %s72, %s73
      %p84 = scmp.eq.s32.totalorder %s22, 0
      %p85 = por %p83, %p84
      %p86 = scmp.ne.s32.totalorder %s72, %s73
      %p87 = scmp.eq.s32.totalorder %s23, 1
      %p88 = por %p86, %p87
      %p90 = scmp.ne.s32.totalorder %s73, %s89
      %p91 = scmp.eq.s32.totalorder %s23, 0
      %p92 = por %p90, %p91
      %s93 = ssub.s32 %s24, %s36
      %s94 = ssub.s32 %s25, %s32
      %s95 = sor.u32 %s93, %s94
      %p96 = scmp.eq.s32.totalorder %s95, 0
      %s98 = sadd.s32 %s97, 1
      %s99 = scalar_select %p96, %s97, %s98
      %p102 = pneg %p96
      %p103 = scmp.eq.s32.totalorder %s17, 1
      %p104 = por %p102, %p103
      %p105 = scmp.ne.s32.totalorder %s97, %s100
      %p106 = scmp.eq.s32.totalorder %s17, 0
      %p107 = por %p105, %p106
      %p108 = scmp.ne.s32.totalorder %s97, %s100
      %p109 = scmp.eq.s32.totalorder %s22, 1
      %p110 = por %p108, %p109
      %p111 = scmp.ne.s32.totalorder %s100, %s101
      %p112 = scmp.eq.s32.totalorder %s22, 0
      %p113 = por %p111, %p112
      %p114 = scmp.ne.s32.totalorder %s100, %s101
      %p115 = scmp.eq.s32.totalorder %s23, 1
      %p116 = por %p114, %p115
      %p118 = scmp.ne.s32.totalorder %s101, %s117
      %p119 = scmp.eq.s32.totalorder %s23, 0
      %p120 = por %p118, %p119
      %p121 = scmp.le.s32.totalorder 1, %s17
      %p122 = scmp.lt.s32.totalorder %s17, 3
      %p123 = pnand %p121, %p122
      %p124 = pneg %p123
      // Predicated region
      $region9: #{tpu_custom_call.1} parent=5 // pred_check
        _
      $region10: #{tpu_custom_call.1} parent=5 // pred_check_branch
        %126 = sbr.rel (%p123) target = $region12
      $region11: #{tpu_custom_call.1} parent=5 // pred_region
        %s127 = ssub.s32 %s17, 1
      $region12: #{tpu_custom_call.1} parent=5 // pred_fallthru
        _
      %p128 = scmp.lt.s32.totalorder %s17, 2
      // Predicated region
      $region13: #{tpu_custom_call.1} parent=5 // pred_check
        %p129 = pneg %p128
      $region14: #{tpu_custom_call.1} parent=5 // pred_check_branch
        %131 = sbr.rel (%p129) target = $region16
      $region15: #{tpu_custom_call.1} parent=5 // pred_region
        // Predicated region
        $region17: #{tpu_custom_call.1} parent=15 // pred_check
          %p132 = pneg %p51
        $region18: #{tpu_custom_call.1} parent=15 // pred_check_branch
          %134 = sbr.rel (%p132) target = $region20
        $region19: #{tpu_custom_call.1} parent=15 // pred_region
          %s135 = sand.u32 %s41, 1
          %s136 = scalar_lea.sflag [#allocation3], %s135
          %s137 = sand.u32 %s41, 1
          %s138 = smul.addr %s137, 8
          %s139 = scalar_lea.vmem [#allocation2], %s138
          %s140 = smul.u32 2, %s24
          %142 = vsyncadd %s136, 0
          %s143 = smul.addr %s140, 2
          %s144 = sadd.s32 %s25, %s143
          %s145 = smul.addr %s144, 4
          %s146 = scalar_lea.hbm %s0, %s145
          %s147 = sshll.u32 %s146, 4
          %s148 = int_to_ptr.hbm [resolvable:$true] %s147
          %s149 = sshll.u32 %s139, 4
          %s150 = int_to_ptr.vmem [resolvable:$true] %s149
          %155 = dma.hbm_to_vmem [thread:$0]  %s148, 128, %s150, %s136, 128, 64, 4
        $region20: #{tpu_custom_call.1} parent=15 // pred_fallthru
          _
        // Predicated region
        $region21: #{tpu_custom_call.1} parent=15 // pred_check
          %p156 = pneg %p79
        $region22: #{tpu_custom_call.1} parent=15 // pred_check_branch
          %158 = sbr.rel (%p156) target = $region24
        $region23: #{tpu_custom_call.1} parent=15 // pred_region
          %s159 = sand.u32 %s69, 1
          %s160 = scalar_lea.sflag [#allocation6], %s159
          %s161 = sand.u32 %s69, 1
          %s162 = smul.addr %s161, 2
          %s163 = scalar_lea.vmem [#allocation5], %s162
          %165 = vsyncadd %s160, 0
          %s166 = smul.addr %s24, 2
          %s167 = sadd.s32 %s25, %s166
          %s168 = smul.addr %s167, 2
          %s169 = scalar_lea.hbm %s1, %s168
          %s171 = sshll.u32 %s169, 4
          %s172 = int_to_ptr.hbm [resolvable:$true] %s171
          %s173 = sshll.u32 %s163, 4
          %s174 = int_to_ptr.vmem [resolvable:$true] %s173
          %176 = dma.hbm_to_vmem [thread:$0]  %s172, 32, %s174, %s160
        $region24: #{tpu_custom_call.1} parent=15 // pred_fallthru
          _
      $region16: #{tpu_custom_call.1} parent=5 // pred_fallthru
        _
      %p177 = scmp.le.s32.totalorder 1, %s17
      %p178 = scmp.lt.s32.totalorder %s17, 3
      %p179 = pnand %p177, %p178
      %p180 = pneg %p179
      // Predicated region
      $region25: #{tpu_custom_call.1} parent=5 // pred_check
        _
      $region26: #{tpu_custom_call.1} parent=5 // pred_check_branch
        %182 = sbr.rel (%p179) target = $region28
      $region27: #{tpu_custom_call.1} parent=5 // pred_region
        %s183 = ssub.s32 %s17, 1
        %s184 = sand.u32 %s44, 1
        %s185 = scalar_lea.sflag [#allocation3], %s184
        %s186 = sand.u32 %s44, 1
        %s187 = smul.addr %s186, 8
        %s188 = scalar_lea.vmem [#allocation2], %s187
        // Predicated region
        $region29: #{tpu_custom_call.1} parent=27 // pred_check
          %p189 = pneg %p57
        $region30: #{tpu_custom_call.1} parent=27 // pred_check_branch
          %191 = sbr.rel (%p189) target = $region32
        $region31: #{tpu_custom_call.1} parent=27 // pred_region
          %193 = dma.done %s185, 128
        $region32: #{tpu_custom_call.1} parent=27 // pred_fallthru
          _
        %s194 = sand.u32 %s72, 1
        %s195 = scalar_lea.sflag [#allocation6], %s194
        %s196 = sand.u32 %s72, 1
        %s197 = smul.addr %s196, 2
        %s198 = scalar_lea.vmem [#allocation5], %s197
        // Predicated region
        $region33: #{tpu_custom_call.1} parent=27 // pred_check
          %p199 = pneg %p85
        $region34: #{tpu_custom_call.1} parent=27 // pred_check_branch
          %201 = sbr.rel (%p199) target = $region36
        $region35: #{tpu_custom_call.1} parent=27 // pred_region
          %203 = dma.done %s195, 32
        $region36: #{tpu_custom_call.1} parent=27 // pred_fallthru
          _
        %s204 = sand.u32 %s44, 1
        %s205 = scalar_lea.sflag [#allocation3], %s204
        %s206 = sand.u32 %s44, 1
        %s207 = smul.addr %s206, 8
        %s208 = scalar_lea.vmem [#allocation2], %s207
        %p209 = pneg %p57
        %p210 = pneg %p54
        %s211 = sand.u32 %s72, 1
        %s212 = scalar_lea.sflag [#allocation6], %s211
        %s213 = sand.u32 %s72, 1
        %s214 = smul.addr %s213, 2
        %s215 = scalar_lea.vmem [#allocation5], %s214
        %p216 = pneg %p85
        %p217 = pneg %p82
        %p218 = pneg %p113
        %p219 = pneg %p110
        %s220 = sand.u32 %s100, 1
        %s221 = scalar_lea.sflag [#allocation4], %s220
        %s222 = sand.u32 %s100, 1
        %s223 = smul.addr %s222, 2
        %s224 = scalar_lea.vmem [#allocation7], %s223
        %s225 = smul.u32 2, %s26
        %v226 = vld [vmem:[%s188] sm:$0xf]
        %v227 = vld [vmem:[%s188 + $0x4] sm:$0xf]
        %v228 = vld [vmem:[%s198] sm:$0x3]
        %vm229 = vcmask 1043456
        %v230 = vsel %vm229, %v226, -inf
        %v231 = vrot.slane %v230, 4
        %v232 = vmax.f32 %v230, %v231
        %v233 = vrot.slane %v232, 2
        %v234 = vmax.f32 %v232, %v233
        %v235 = vrot.slane %v234, 1
        %v236 = vmax.f32 %v234, %v235
        %v237 = vsel %vm229, %v227, -inf
        %v238 = vrot.slane %v237, 4
        %v239 = vmax.f32 %v237, %v238
        %v240 = vrot.slane %v239, 2
        %v241 = vmax.f32 %v239, %v240
        %v242 = vrot.slane %v241, 1
        %v243 = vmax.f32 %v241, %v242
        %v244 = vsub.f32 %v226, %v236
        %v245 = vsub.f32 %v227, %v243
        %v246 = vmul.f32 %v244, 1.442695
        %v247 = vpow.pop %v246
        %v248 = vmul.f32 %v245, 1.442695
        %v249 = vpow.pop %v248
        %v250 = vsel %vm229, %v247, 0.0
        %v251 = vrot.slane %v250, 4
        %v252 = vadd.f32 %v250, %v251
        %v253 = vrot.slane %v252, 2
        %v254 = vadd.f32 %v252, %v253
        %v255 = vrot.slane %v254, 1
        %v256 = vadd.f32 %v254, %v255
        %v257 = vsel %vm229, %v249, 0.0
        %v258 = vrot.slane %v257, 4
        %v259 = vadd.f32 %v257, %v258
        %v260 = vrot.slane %v259, 2
        %v261 = vadd.f32 %v259, %v260
        %v262 = vrot.slane %v261, 1
        %v263 = vadd.f32 %v261, %v262
        %v264 = vrcp.pop %v256
        %v265 = vmul.f32 %v256, %v264
        %v266 = vsub.f32 1.0, %v265
        %v267 = vmul.f32 %v264, %v266
        %v268 = vadd.f32 %v264, %v267
        %vm269 = vweird.f32 %v256
        %vm270 = vweird.f32 %v264
        %vm271 = vmor %vm269, %vm270
        %v272 = vsel %vm271, %v264, %v268
        %v273 = vand.u32 2147483647, %v256
        %vm274 = vcmp.eq.f32.partialorder %v273, 8.507059e+37
        %v275 = vand.u32 %v256, 2147483648
        %v276 = vor.u32 1.1754944e-38, %v275
        %v277 = vsel %vm274, %v276, %v272
        %v278 = vrcp.pop %v263
        %v279 = vmul.f32 %v263, %v278
        %v280 = vsub.f32 1.0, %v279
        %v281 = vmul.f32 %v278, %v280
        %v282 = vadd.f32 %v278, %v281
        %vm283 = vweird.f32 %v263
        %vm284 = vweird.f32 %v278
        %vm285 = vmor %vm283, %vm284
        %v286 = vsel %vm285, %v278, %v282
        %v287 = vand.u32 2147483647, %v263
        %vm288 = vcmp.eq.f32.partialorder %v287, 8.507059e+37
        %v289 = vand.u32 %v263, 2147483648
        %v290 = vor.u32 1.1754944e-38, %v289
        %v291 = vsel %vm288, %v290, %v286
        %v292 = vmul.f32 %v247, %v277
        %v293 = vmul.f32 %v249, %v291
        %v294 = vadd.f32 %v292, 1e-08
        %v295 = vadd.f32 %v293, 1e-08
        %v296 = vsub.f32 1.0, %v294
        %v297 = vsub.f32 1.0, %v295
        %v298 = vmul.f32 %v296, %v296
        %v299 = vmul.f32 %v297, %v297
        %v300 = vmul.f32 %v298, -0.5
        %v301 = vmul.f32 %v299, -0.5
        %v302 = vlog2.pop %v294
        %v303 = vmul.f32 %v302, 0.6931472
        %v304 = vlog2.pop %v295
        %v305 = vmul.f32 %v304, 0.6931472
        %v306 = vmul.f32 %v300, %v303
        %v307 = vmul.f32 %v301, %v305
        %v308 = vlaneseq
        %v309 = vshrl.u32 %v308, 7
        %v310 = vrot.slane %v228, 1
        %v311 = vperm.slane %v228, 0
        %v312 = vperm.slane %v310, 0
        %vm313 = vcmp.eq.s32.totalorder %v309, %v311
        %vm314 = vcmp.eq.s32.totalorder %v309, %v312
        %v315 = vsel %vm313, 1.000001, 1e-06
        %v316 = vsel %vm314, 1.000001, 1e-06
        %v317 = vmul.f32 %v315, %v306
        %v318 = vmul.f32 %v316, %v307
        %v319 = vsel %vm229, %v317, 0.0
        %v320 = vrot.slane %v319, 4
        %v321 = vadd.f32 %v319, %v320
        %v322 = vrot.slane %v321, 2
        %v323 = vadd.f32 %v321, %v322
        %v324 = vrot.slane %v323, 1
        %v325 = vadd.f32 %v323, %v324
        %v326 = vsel %vm229, %v318, 0.0
        %v327 = vrot.slane %v326, 4
        %v328 = vadd.f32 %v326, %v327
        %v329 = vrot.slane %v328, 2
        %v330 = vadd.f32 %v328, %v329
        %v331 = vrot.slane %v330, 1
        %v332 = vadd.f32 %v330, %v331
        %vm335 = vcmask 1041409
        %v336 = vsel %vm335, %v332, %v325
        %338 = vst [vmem:[%s224] sm:$0x3] %v336
        %s339 = sand.u32 %s100, 1
        %s340 = scalar_lea.sflag [#allocation4], %s339
        %s341 = sand.u32 %s100, 1
        %s342 = smul.addr %s341, 2
        %s343 = scalar_lea.vmem [#allocation7], %s342
        // Predicated region
        $region37: #{tpu_custom_call.1} parent=27 // pred_check
          %p344 = pneg %p110
        $region38: #{tpu_custom_call.1} parent=27 // pred_check_branch
          %346 = sbr.rel (%p344) target = $region40
        $region39: #{tpu_custom_call.1} parent=27 // pred_region
          %348 = vsyncadd %s340, 0
          %s349 = smul.addr %s26, 2
          %s350 = sadd.s32 %s27, %s349
          %s351 = smul.addr %s350, 2
          %s352 = scalar_lea.hbm %s2, %s351
          %s354 = sshll.u32 %s343, 4
          %s355 = int_to_ptr.vmem [resolvable:$true] %s354
          %s356 = sshll.u32 %s352, 4
          %s357 = int_to_ptr.hbm [resolvable:$true] %s356
          %359 = dma.vmem_to_hbm [thread:$0]  %s355, 32, %s357, %s340
        $region40: #{tpu_custom_call.1} parent=27 // pred_fallthru
          _
      $region28: #{tpu_custom_call.1} parent=5 // pred_fallthru
        _
      %p360 = scmp.le.s32.totalorder 2, %s17
      // Predicated region
      $region41: #{tpu_custom_call.1} parent=5 // pred_check
        %p361 = pneg %p360
      $region42: #{tpu_custom_call.1} parent=5 // pred_check_branch
        %363 = sbr.rel (%p361) target = $region44
      $region43: #{tpu_custom_call.1} parent=5 // pred_region
        %s364 = ssub.s32 %s17, 2
        // Predicated region
        $region45: #{tpu_custom_call.1} parent=43 // pred_check
          %p365 = pneg %p116
        $region46: #{tpu_custom_call.1} parent=43 // pred_check_branch
          %367 = sbr.rel (%p365) target = $region48
        $region47: #{tpu_custom_call.1} parent=43 // pred_region
          %s368 = sand.u32 %s101, 1
          %s369 = scalar_lea.sflag [#allocation4], %s368
          %s370 = sand.u32 %s101, 1
          %s371 = smul.addr %s370, 2
          %s372 = scalar_lea.vmem [#allocation7], %s371
          %374 = dma.done %s369, 32
        $region48: #{tpu_custom_call.1} parent=43 // pred_fallthru
          _
      $region44: #{tpu_custom_call.1} parent=5 // pred_fallthru
        _
    $region6: #{tpu_custom_call.1} parent=1 // loop_footer
      %s21 = sadd.s32 1, %s17
    $region7: #{tpu_custom_call.1} parent=1 // loop_footer_branch
      %16 = sbr.rel target = $region3
    $region8: #{tpu_custom_call.1} parent=1 // loop_exit
      _
    %375 = vsyncpa [#allocation3], 1
    %s376 = scalar_lea.sflag [#allocation3], 1
    %377 = vsyncpa %s376, 1
    %378 = vsyncpa [#allocation6], 1
    %s379 = scalar_lea.sflag [#allocation6], 1
    %380 = vsyncpa %s379, 1
    %381 = vsyncpa [#allocation4], 1
    %s382 = scalar_lea.sflag [#allocation4], 1
    %383 = vsyncpa %s382, 1

</llo_original>
